<compile_context>
chip_gen: v5e
topology: v5e:2x2
jax: 0.10.0
libtpu: 0.0.40
codegen_flags: <defaults>
</compile_context>

<pallas_src>
import functools

import jax
import jax.numpy as jnp
from jax import lax
from jax.experimental import pallas as pl
from jax.experimental.pallas import tpu as pltpu

EPS = 1e-5


def _layernorm_2d_batched(x, g, b):
    """LayerNorm over the last two dims of a (TB, S, C) block, per batch row."""
    n = x.shape[-1] * x.shape[-2]
    s = jnp.sum(jnp.sum(x, axis=-1, keepdims=True), axis=-2, keepdims=True)
    mu = s / n
    d = x - mu
    var = jnp.sum(jnp.sum(d * d, axis=-1, keepdims=True), axis=-2, keepdims=True) / n
    return d * lax.rsqrt(var + EPS) * g + b


def _mixer_kernel(
    x_ref,       # (TB, S, Cin)        dynamic input block (f32)
    vb_ref,      # (TB, 1, FF+Cout)    precomputed static bias: [v@Wf1v.T+bf1 | v@Wpv.T+bp]
    wbig_ref,    # (TB*S, TB*S)        block-diagonal time-mixing weight (compute_dtype)
    bt_ref,      # (S, 1)              time-mixing fc1 bias
    g1_ref,      # (S, Cin)            LayerNorm-1 gamma
    b1_ref,      # (S, Cin)            LayerNorm-1 beta
    wfx_ref,     # (Cin, FF+Cout)      fused [fc1 | projection] weight (compute_dtype)
    wf2_ref,     # (FF, Cout)          fc2 weight (compute_dtype)
    bf2_ref,     # (1, Cout)
    g2_ref,      # (S, Cout)           LayerNorm-2 gamma
    b2_ref,      # (S, Cout)           LayerNorm-2 beta
    o_ref,       # (TB, S, Cout) or (TB, 1, S*Cout) when lane-dense
    *, compute_dtype,
):
    tb, S, Cin = x_ref.shape
    FF, Cout = wf2_ref.shape
    rows = tb * S
    cd = compute_dtype

    x = x_ref[...]                                        # (TB, S, Cin) f32
    x2 = x.reshape(rows, Cin)

    # ---------------- TimeMixing: one 2D GEMM, batch folded into M ----------------
    # res[b*S+s, c] = sum_t Wt[s, t] * x[b, t, c]   (W_big = kron(I_TB, Wt))
    res = jnp.dot(wbig_ref[...], x2.astype(cd),
                  preferred_element_type=jnp.float32).reshape(tb, S, Cin)
    y = x + jnp.maximum(res + bt_ref[...][None], 0.0)     # residual + ReLU (dropout=id)
    y = _layernorm_2d_batched(y, g1_ref[...][None], b1_ref[...][None])

    # -------- ConditionalFeatureMixing: fused [fc1 | projection] GEMM, M = TB*S --------
    fused = jnp.dot(y.reshape(rows, Cin).astype(cd), wfx_ref[...],
                    preferred_element_type=jnp.float32).reshape(tb, S, FF + Cout)
    fused = fused + vb_ref[...]                           # per-batch static-feature bias
    h = jnp.maximum(fused[:, :, :FF], 0.0)                # fc1 half starts at lane 0
    h2 = jnp.dot(h.reshape(rows, FF).astype(cd), wf2_ref[...],
                 preferred_element_type=jnp.float32).reshape(tb, S, Cout)
    z = fused[:, :, FF:] + h2 + bf2_ref[...][None]        # projection + fc2 path

    z = _layernorm_2d_batched(z, g2_ref[...][None], b2_ref[...][None])
    o_ref[...] = z.reshape(o_ref.shape).astype(o_ref.dtype)


def _choose_block_b(B, S, Cin, Cout, FF, w_itemsize):
    """Batch tile: fold TB*S rows into the matmul M dim (target ~512 rows),
    bounded by a conservative VMEM working-set budget that fits every TPU
    generation (v5e 16 MiB scoped default, v7x 64 MiB physical VMEM)."""
    tb = max(1, min(B, 512 // max(S, 1)))

    def working_set(t):
        r = t * S
        dyn = 2 * 4 * (r * Cin + t * (FF + Cout) + r * Cout)           # dbl-buffered blocks
        wts = 2 * w_itemsize * (r * r + Cin * (FF + Cout) + FF * Cout)  # dbl-buffered weights
        live = 4 * r * (3 * Cin + 2 * (FF + Cout) + 2 * Cout)           # live intermediates
        return dyn + wts + live

    while tb > 1 and working_set(tb) > 8 * 2**20:
        tb -= 1
    # v7x megacore: keep >=2 "parallel" grid steps when the half-tile is still MXU-sized.
    if tb == B and B > 1 and (tb // 2) * S >= 256:
        tb = (tb + 1) // 2
    return tb


def conditional_mixer_layer(x, x_static, params, *, block_b=None,
                            compute_dtype=jnp.bfloat16):
    """x: (B, S, Cin) f32, x_static: (B, Cstatic) f32 -> (B, S, Cout) f32.

    compute_dtype controls the MXU operand dtype only (f32 accumulation and f32
    LayerNorm/elementwise throughout).  bfloat16 is the full-rate MXU path on
    v5e/v6e/v7x; pass jnp.float32 for reference-exact numerics.
    """
    B, S, Cin = x.shape
    Wt, bt, g1, b1, Ws, bs, Wp, bp, Wf1, bf1, Wf2, bf2, g2, b2 = params
    Cout = Ws.shape[0]
    FF = Wf1.shape[0]
    w_itemsize = jnp.dtype(compute_dtype).itemsize

    # ---- hoisted static-feature path (tiny M=1 dots become batched XLA GEMMs) ----
    v = x_static @ Ws.T + bs                                        # (B, Cout)
    vb = jnp.concatenate([v @ Wf1[:, Cin:].T + bf1,                 # fc1 v-part + bias
                          v @ Wp[:, Cin:].T + bp], axis=-1)         # projection v-part + bias
    vb = vb.astype(jnp.float32)                                     # (B, FF + Cout)

    # ---- fused dynamic-side weight, [fc1 | projection] order; pre-cast weights ----
    w_fused = jnp.concatenate([Wf1[:, :Cin].T, Wp[:, :Cin].T], axis=1).astype(compute_dtype)
    wf2_t = Wf2.T.astype(compute_dtype)                             # (FF, Cout)
    bt2 = bt.reshape(S, 1).astype(jnp.float32)
    bf2_2 = bf2.reshape(1, Cout).astype(jnp.float32)

    # ---- batch tile + padding (no tb=1 fallback for awkward batch sizes) ----
    if block_b is None:
        block_b = _choose_block_b(B, S, Cin, Cout, FF, w_itemsize)
    tb = int(block_b)
    bpad = ((B + tb - 1) // tb) * tb
    if bpad != B:
        x = jnp.pad(x, ((0, bpad - B), (0, 0), (0, 0)))
        vb = jnp.pad(vb, ((0, bpad - B), (0, 0)))
    vb = vb.reshape(bpad, 1, FF + Cout)

    # ---- block-diagonal time-mixing weight: one 2D GEMM per grid step ----
    rows = tb * S
    w_big = jnp.kron(jnp.eye(tb, dtype=Wt.dtype), Wt).astype(compute_dtype)  # (rows, rows)

    # ---- lane-dense output slab when the flattened row is a multiple of 128 ----
    lane_dense = (S * Cout) % 128 == 0
    if lane_dense:
        out_shape = jax.ShapeDtypeStruct((bpad, 1, S * Cout), jnp.float32)
        out_spec = pl.BlockSpec((tb, 1, S * Cout), lambda b: (b, 0, 0))
    else:
        out_shape = jax.ShapeDtypeStruct((bpad, S, Cout), jnp.float32)
        out_spec = pl.BlockSpec((tb, S, Cout), lambda b: (b, 0, 0))

    kernel = functools.partial(_mixer_kernel, compute_dtype=compute_dtype)

    steps = bpad // tb
    flops = 2 * bpad * S * (rows * Cin + Cin * (FF + Cout) + FF * Cout)
    weight_bytes = (w_big.size + w_fused.size + wf2_t.size) * w_itemsize + \
        4 * (bt2.size + g1.size + b1.size + bf2_2.size + g2.size + b2.size)
    bytes_accessed = 4 * (x.size + vb.size + bpad * S * Cout) + weight_bytes

    # Explicit scoped-VMEM limit (v5e defaults to 16 MiB); block chooser keeps the
    # working set well under this on all generations (v7x physical VMEM = 64 MiB).
    dyn_bytes = 2 * 4 * (rows * Cin + tb * (FF + Cout) + rows * Cout)
    live_bytes = 4 * rows * (3 * Cin + 2 * (FF + Cout) + 2 * Cout)
    est = 2 * weight_bytes + dyn_bytes + live_bytes
    vmem_limit = int(min(48 * 2**20, max(24 * 2**20, 2 * est)))

    def full(a):  # whole-array block, constant index (constant weights)
        return pl.BlockSpec(a.shape, lambda b: (0,) * a.ndim)

    out = pl.pallas_call(
        kernel,
        out_shape=out_shape,
        grid=(steps,),
        in_specs=[
            pl.BlockSpec((tb, S, Cin), lambda b: (b, 0, 0)),
            pl.BlockSpec((tb, 1, FF + Cout), lambda b: (b, 0, 0)),
            full(w_big), full(bt2), full(g1), full(b1),
            full(w_fused), full(wf2_t), full(bf2_2), full(g2), full(b2),
        ],
        out_specs=out_spec,
        compiler_params=pltpu.CompilerParams(
            dimension_semantics=("parallel",),
            vmem_limit_bytes=vmem_limit),
        cost_estimate=pl.CostEstimate(flops=flops, transcendentals=2 * bpad,
                                      bytes_accessed=bytes_accessed),
    )(x, vb, w_big, bt2, g1, b1, w_fused, wf2_t, bf2_2, g2, b2)

    if lane_dense:
        out = out.reshape(bpad, S, Cout)
    return out[:B] if bpad != B else out


# ------------------------- pure-JAX reference -------------------------
def _layernorm_2d(x, g, b):
    mu = jnp.mean(x, axis=(-2, -1), keepdims=True)
    var = jnp.mean((x - mu) ** 2, axis=(-2, -1), keepdims=True)
    return (x - mu) * lax.rsqrt(var + EPS) * g + b


def reference_forward(x, x_static, params):
    Wt, bt, g1, b1, Ws, bs, Wp, bp, Wf1, bf1, Wf2, bf2, g2, b2 = params
    # TimeMixing
    xt = jnp.swapaxes(x, 1, 2)                         # (B, C, S)
    xt = jnp.maximum(xt @ Wt.T + bt, 0.0)
    x_res = jnp.swapaxes(xt, 1, 2)                     # (B, S, C)
    y = _layernorm_2d(x + x_res, g1, b1)
    # ConditionalFeatureMixing
    v = x_static @ Ws.T + bs                           # (B, Cout)
    v = jnp.repeat(v[:, None, :], x.shape[1], axis=1)  # (B, S, Cout)
    cat = jnp.concatenate([y, v], axis=-1)
    proj = cat @ Wp.T + bp
    h = jnp.maximum(cat @ Wf1.T + bf1, 0.0)
    z = proj + (h @ Wf2.T + bf2)
    return _layernorm_2d(z, g2, b2)


def _make_params(keys, S, Cin, Cout, Cstatic, FF):
    f32 = jnp.float32
    return (
        jax.random.normal(keys[0], (S, S), f32) * 0.2,              # Wt  (time fc1)
        jax.random.normal(keys[1], (S,), f32) * 0.1,                # bt
        1.0 + 0.05 * jax.random.normal(keys[2], (S, Cin), f32),     # g1  (LN1 gamma)
        0.05 * jax.random.normal(keys[3], (S, Cin), f32),           # b1  (LN1 beta)
        jax.random.normal(keys[4], (Cout, Cstatic), f32) * 0.2,     # Ws  (fr_static)
        jax.random.normal(keys[5], (Cout,), f32) * 0.1,             # bs
        jax.random.normal(keys[6], (Cout, Cin + Cout), f32) * 0.2,  # Wp  (projection)
        jax.random.normal(keys[7], (Cout,), f32) * 0.1,             # bp
        jax.random.normal(keys[8], (FF, Cin + Cout), f32) * 0.2,    # Wf1
        jax.random.normal(keys[9], (FF,), f32) * 0.1,               # bf1
        jax.random.normal(keys[10], (Cout, FF), f32) * 0.2,         # Wf2
        jax.random.normal(keys[11], (Cout,), f32) * 0.1,            # bf2
        1.0 + 0.05 * jax.random.normal(keys[12], (S, Cout), f32),   # g2  (LN2 gamma)
        0.05 * jax.random.normal(keys[13], (S, Cout), f32),         # b2  (LN2 beta)
    )


if __name__ == "__main__":
    f32 = jnp.float32
    key = jax.random.PRNGKey(0)

    # ---- config 1: lane-dense output path (S*Cout % 128 == 0), auto batch tile ----
    B, S, Cin, Cout, Cstatic, FF = 4, 8, 4, 16, 3, 32
    ks = jax.random.split(key, 16)
    x = jax.random.normal(ks[0], (B, S, Cin), f32)
    x_static = jax.random.normal(ks[1], (B, Cstatic), f32)
    params = _make_params(ks[2:], S, Cin, Cout, Cstatic, FF)
    ref = reference_forward(x, x_static, params)

    out = jax.block_until_ready(
        jax.jit(functools.partial(conditional_mixer_layer,
                                  compute_dtype=jnp.float32))(x, x_static, params))
    assert out.shape == (B, S, Cout)
    assert jnp.allclose(out, ref, atol=1e-4, rtol=1e-4), (
        f"f32 max abs err {jnp.max(jnp.abs(out - ref))}")

    # bf16 MXU-operand path (f32 accumulation); looser tolerance is expected.
    out_bf16 = jax.block_until_ready(
        jax.jit(functools.partial(conditional_mixer_layer,
                                  compute_dtype=jnp.bfloat16))(x, x_static, params))
    assert jnp.allclose(out_bf16, ref, atol=1e-1, rtol=1e-1), (
        f"bf16 max abs err {jnp.max(jnp.abs(out_bf16 - ref))}")

    # ---- config 2: non-lane-dense output + batch padding (B=3 with block_b=2) ----
    B2, S2, Cin2, Cout2, Cst2, FF2 = 3, 8, 4, 8, 3, 16
    ks2 = jax.random.split(jax.random.PRNGKey(1), 16)
    x2 = jax.random.normal(ks2[0], (B2, S2, Cin2), f32)
    xs2 = jax.random.normal(ks2[1], (B2, Cst2), f32)
    params2 = _make_params(ks2[2:], S2, Cin2, Cout2, Cst2, FF2)
    ref2 = reference_forward(x2, xs2, params2)

    out2 = jax.block_until_ready(
        jax.jit(functools.partial(conditional_mixer_layer, block_b=2,
                                  compute_dtype=jnp.float32))(x2, xs2, params2))
    assert out2.shape == (B2, S2, Cout2)
    assert jnp.allclose(out2, ref2, atol=1e-4, rtol=1e-4), (
        f"padded-case max abs err {jnp.max(jnp.abs(out2 - ref2))}")

    print("KERNEL_OK")
</pallas_src>

<mosaic_0001>
module attributes {stable_mosaic.version = 11 : i64} {
  func.func @_mixer_kernel(%arg0: i32, %arg1: memref<4x8x4xf32, #tpu.memory_space<vmem>>, %arg2: memref<4x1x48xf32, #tpu.memory_space<vmem>>, %arg3: memref<32x32xf32, #tpu.memory_space<vmem>>, %arg4: memref<8x1xf32, #tpu.memory_space<vmem>>, %arg5: memref<8x4xf32, #tpu.memory_space<vmem>>, %arg6: memref<8x4xf32, #tpu.memory_space<vmem>>, %arg7: memref<4x48xf32, #tpu.memory_space<vmem>>, %arg8: memref<32x16xf32, #tpu.memory_space<vmem>>, %arg9: memref<1x16xf32, #tpu.memory_space<vmem>>, %arg10: memref<8x16xf32, #tpu.memory_space<vmem>>, %arg11: memref<8x16xf32, #tpu.memory_space<vmem>>, %arg12: memref<4x1x128xf32, #tpu.memory_space<vmem>>) attributes {dimension_semantics = [#tpu.dimension_semantics<parallel>], iteration_bounds = array<i64: 1>, scalar_prefetch = 0 : i64, scratch_operands = 0 : i64, tpu.core_type = #tpu.core_type<tc>, window_params = [{transform_indices = @transform_0, window_bounds = array<i64: 4, 8, 4>}, {transform_indices = @transform_1, window_bounds = array<i64: 4, 1, 48>}, {pipeline_mode = #tpu.pipeline_mode<synchronous>, transform_indices = @transform_2, window_bounds = array<i64: 32, 32>}, {pipeline_mode = #tpu.pipeline_mode<synchronous>, transform_indices = @transform_3, window_bounds = array<i64: 8, 1>}, {pipeline_mode = #tpu.pipeline_mode<synchronous>, transform_indices = @transform_4, window_bounds = array<i64: 8, 4>}, {pipeline_mode = #tpu.pipeline_mode<synchronous>, transform_indices = @transform_5, window_bounds = array<i64: 8, 4>}, {pipeline_mode = #tpu.pipeline_mode<synchronous>, transform_indices = @transform_6, window_bounds = array<i64: 4, 48>}, {pipeline_mode = #tpu.pipeline_mode<synchronous>, transform_indices = @transform_7, window_bounds = array<i64: 32, 16>}, {pipeline_mode = #tpu.pipeline_mode<synchronous>, transform_indices = @transform_8, window_bounds = array<i64: 1, 16>}, {pipeline_mode = #tpu.pipeline_mode<synchronous>, transform_indices = @transform_9, window_bounds = array<i64: 8, 16>}, {pipeline_mode = #tpu.pipeline_mode<synchronous>, transform_indices = @transform_10, window_bounds = array<i64: 8, 16>}, {transform_indices = @transform_11, window_bounds = array<i64: 4, 1, 128>}]} {
    %c0 = arith.constant 0 : index
    %c0_0 = arith.constant 0 : index
    %c0_1 = arith.constant 0 : index
    %0 = vector.load %arg1[%c0, %c0_0, %c0_1] : memref<4x8x4xf32, #tpu.memory_space<vmem>>, vector<4x8x4xf32>
    %1 = vector.shape_cast %0 : vector<4x8x4xf32> to vector<32x4xf32>
    %c0_2 = arith.constant 0 : index
    %c0_3 = arith.constant 0 : index
    %2 = vector.load %arg3[%c0_2, %c0_3] : memref<32x32xf32, #tpu.memory_space<vmem>>, vector<32x32xf32>
    %cst = arith.constant dense<0.000000e+00> : vector<32x4xf32>
    %3 = tpu.matmul %2, %1, %cst {dimension_numbers = #tpu.dot_dimension_numbers<[1], [0], [0], [1], [0, 0, 1, 1], [], []>} : vector<32x32xf32>, vector<32x4xf32>, vector<32x4xf32> -> vector<32x4xf32>
    %4 = vector.shape_cast %3 : vector<32x4xf32> to vector<4x8x4xf32>
    %c0_4 = arith.constant 0 : index
    %c0_5 = arith.constant 0 : index
    %5 = vector.load %arg4[%c0_4, %c0_5] : memref<8x1xf32, #tpu.memory_space<vmem>>, vector<8x1xf32>
    %6 = vector.shape_cast %5 : vector<8x1xf32> to vector<1x8x1xf32>
    %7 = vector.broadcast %6 : vector<1x8x1xf32> to vector<4x8x4xf32>
    %8 = arith.addf %4, %7 : vector<4x8x4xf32>
    %cst_6 = arith.constant 0.000000e+00 : f32
    %9 = vector.broadcast %cst_6 : f32 to vector<4x8x4xf32>
    %10 = arith.maximumf %8, %9 : vector<4x8x4xf32>
    %11 = arith.addf %0, %10 : vector<4x8x4xf32>
    %c0_7 = arith.constant 0 : index
    %c0_8 = arith.constant 0 : index
    %12 = vector.load %arg5[%c0_7, %c0_8] : memref<8x4xf32, #tpu.memory_space<vmem>>, vector<8x4xf32>
    %13 = vector.shape_cast %12 : vector<8x4xf32> to vector<1x8x4xf32>
    %c0_9 = arith.constant 0 : index
    %c0_10 = arith.constant 0 : index
    %14 = vector.load %arg6[%c0_9, %c0_10] : memref<8x4xf32, #tpu.memory_space<vmem>>, vector<8x4xf32>
    %15 = vector.shape_cast %14 : vector<8x4xf32> to vector<1x8x4xf32>
    %cst_11 = arith.constant dense<0.000000e+00> : vector<4x8xf32>
    %16 = vector.multi_reduction <add>, %11, %cst_11 [2] : vector<4x8x4xf32> to vector<4x8xf32>
    %17 = vector.shape_cast %16 : vector<4x8xf32> to vector<4x8x1xf32>
    %cst_12 = arith.constant dense<0.000000e+00> : vector<4x1xf32>
    %18 = vector.multi_reduction <add>, %17, %cst_12 [1] : vector<4x8x1xf32> to vector<4x1xf32>
    %19 = vector.shape_cast %18 : vector<4x1xf32> to vector<4x1x1xf32>
    %cst_13 = arith.constant 3.200000e+01 : f32
    %20 = vector.broadcast %cst_13 : f32 to vector<4x1x1xf32>
    %21 = arith.divf %19, %20 : vector<4x1x1xf32>
    %22 = vector.broadcast %21 : vector<4x1x1xf32> to vector<4x8x4xf32>
    %23 = arith.subf %11, %22 : vector<4x8x4xf32>
    %24 = arith.mulf %23, %23 : vector<4x8x4xf32>
    %cst_14 = arith.constant dense<0.000000e+00> : vector<4x8xf32>
    %25 = vector.multi_reduction <add>, %24, %cst_14 [2] : vector<4x8x4xf32> to vector<4x8xf32>
    %26 = vector.shape_cast %25 : vector<4x8xf32> to vector<4x8x1xf32>
    %cst_15 = arith.constant dense<0.000000e+00> : vector<4x1xf32>
    %27 = vector.multi_reduction <add>, %26, %cst_15 [1] : vector<4x8x1xf32> to vector<4x1xf32>
    %28 = vector.shape_cast %27 : vector<4x1xf32> to vector<4x1x1xf32>
    %cst_16 = arith.constant 3.200000e+01 : f32
    %29 = vector.broadcast %cst_16 : f32 to vector<4x1x1xf32>
    %30 = arith.divf %28, %29 : vector<4x1x1xf32>
    %cst_17 = arith.constant 9.99999974E-6 : f32
    %31 = vector.broadcast %cst_17 : f32 to vector<4x1x1xf32>
    %32 = arith.addf %30, %31 : vector<4x1x1xf32>
    %33 = math.rsqrt %32 : vector<4x1x1xf32>
    %34 = vector.broadcast %33 : vector<4x1x1xf32> to vector<4x8x4xf32>
    %35 = arith.mulf %23, %34 : vector<4x8x4xf32>
    %36 = vector.broadcast %13 : vector<1x8x4xf32> to vector<4x8x4xf32>
    %37 = arith.mulf %35, %36 : vector<4x8x4xf32>
    %38 = vector.broadcast %15 : vector<1x8x4xf32> to vector<4x8x4xf32>
    %39 = arith.addf %37, %38 : vector<4x8x4xf32>
    %40 = vector.shape_cast %39 : vector<4x8x4xf32> to vector<32x4xf32>
    %c0_18 = arith.constant 0 : index
    %c0_19 = arith.constant 0 : index
    %41 = vector.load %arg7[%c0_18, %c0_19] : memref<4x48xf32, #tpu.memory_space<vmem>>, vector<4x48xf32>
    %cst_20 = arith.constant dense<0.000000e+00> : vector<32x48xf32>
    %42 = tpu.matmul %40, %41, %cst_20 {dimension_numbers = #tpu.dot_dimension_numbers<[1], [0], [0], [1], [0, 0, 1, 1], [], []>} : vector<32x4xf32>, vector<4x48xf32>, vector<32x48xf32> -> vector<32x48xf32>
    %43 = vector.shape_cast %42 : vector<32x48xf32> to vector<4x8x48xf32>
    %c0_21 = arith.constant 0 : index
    %c0_22 = arith.constant 0 : index
    %c0_23 = arith.constant 0 : index
    %44 = vector.load %arg2[%c0_21, %c0_22, %c0_23] : memref<4x1x48xf32, #tpu.memory_space<vmem>>, vector<4x1x48xf32>
    %45 = vector.broadcast %44 : vector<4x1x48xf32> to vector<4x8x48xf32>
    %46 = arith.addf %43, %45 : vector<4x8x48xf32>
    %47 = vector.extract_strided_slice %46 {offsets = [0, 0, 0], sizes = [4, 8, 32], strides = [1, 1, 1]} : vector<4x8x48xf32> to vector<4x8x32xf32>
    %cst_24 = arith.constant 0.000000e+00 : f32
    %48 = vector.broadcast %cst_24 : f32 to vector<4x8x32xf32>
    %49 = arith.maximumf %47, %48 : vector<4x8x32xf32>
    %50 = vector.shape_cast %49 : vector<4x8x32xf32> to vector<32x32xf32>
    %c0_25 = arith.constant 0 : index
    %c0_26 = arith.constant 0 : index
    %51 = vector.load %arg8[%c0_25, %c0_26] : memref<32x16xf32, #tpu.memory_space<vmem>>, vector<32x16xf32>
    %cst_27 = arith.constant dense<0.000000e+00> : vector<32x16xf32>
    %52 = tpu.matmul %50, %51, %cst_27 {dimension_numbers = #tpu.dot_dimension_numbers<[1], [0], [0], [1], [0, 0, 1, 1], [], []>} : vector<32x32xf32>, vector<32x16xf32>, vector<32x16xf32> -> vector<32x16xf32>
    %53 = vector.shape_cast %52 : vector<32x16xf32> to vector<4x8x16xf32>
    %54 = vector.extract_strided_slice %46 {offsets = [0, 0, 32], sizes = [4, 8, 16], strides = [1, 1, 1]} : vector<4x8x48xf32> to vector<4x8x16xf32>
    %55 = arith.addf %54, %53 : vector<4x8x16xf32>
    %c0_28 = arith.constant 0 : index
    %c0_29 = arith.constant 0 : index
    %56 = vector.load %arg9[%c0_28, %c0_29] : memref<1x16xf32, #tpu.memory_space<vmem>>, vector<1x16xf32>
    %57 = vector.shape_cast %56 : vector<1x16xf32> to vector<1x1x16xf32>
    %58 = vector.broadcast %57 : vector<1x1x16xf32> to vector<4x8x16xf32>
    %59 = arith.addf %55, %58 : vector<4x8x16xf32>
    %c0_30 = arith.constant 0 : index
    %c0_31 = arith.constant 0 : index
    %60 = vector.load %arg10[%c0_30, %c0_31] : memref<8x16xf32, #tpu.memory_space<vmem>>, vector<8x16xf32>
    %61 = vector.shape_cast %60 : vector<8x16xf32> to vector<1x8x16xf32>
    %c0_32 = arith.constant 0 : index
    %c0_33 = arith.constant 0 : index
    %62 = vector.load %arg11[%c0_32, %c0_33] : memref<8x16xf32, #tpu.memory_space<vmem>>, vector<8x16xf32>
    %63 = vector.shape_cast %62 : vector<8x16xf32> to vector<1x8x16xf32>
    %cst_34 = arith.constant dense<0.000000e+00> : vector<4x8xf32>
    %64 = vector.multi_reduction <add>, %59, %cst_34 [2] : vector<4x8x16xf32> to vector<4x8xf32>
    %65 = vector.shape_cast %64 : vector<4x8xf32> to vector<4x8x1xf32>
    %cst_35 = arith.constant dense<0.000000e+00> : vector<4x1xf32>
    %66 = vector.multi_reduction <add>, %65, %cst_35 [1] : vector<4x8x1xf32> to vector<4x1xf32>
    %67 = vector.shape_cast %66 : vector<4x1xf32> to vector<4x1x1xf32>
    %cst_36 = arith.constant 1.280000e+02 : f32
    %68 = vector.broadcast %cst_36 : f32 to vector<4x1x1xf32>
    %69 = arith.divf %67, %68 : vector<4x1x1xf32>
    %70 = vector.broadcast %69 : vector<4x1x1xf32> to vector<4x8x16xf32>
    %71 = arith.subf %59, %70 : vector<4x8x16xf32>
    %72 = arith.mulf %71, %71 : vector<4x8x16xf32>
    %cst_37 = arith.constant dense<0.000000e+00> : vector<4x8xf32>
    %73 = vector.multi_reduction <add>, %72, %cst_37 [2] : vector<4x8x16xf32> to vector<4x8xf32>
    %74 = vector.shape_cast %73 : vector<4x8xf32> to vector<4x8x1xf32>
    %cst_38 = arith.constant dense<0.000000e+00> : vector<4x1xf32>
    %75 = vector.multi_reduction <add>, %74, %cst_38 [1] : vector<4x8x1xf32> to vector<4x1xf32>
    %76 = vector.shape_cast %75 : vector<4x1xf32> to vector<4x1x1xf32>
    %cst_39 = arith.constant 1.280000e+02 : f32
    %77 = vector.broadcast %cst_39 : f32 to vector<4x1x1xf32>
    %78 = arith.divf %76, %77 : vector<4x1x1xf32>
    %cst_40 = arith.constant 9.99999974E-6 : f32
    %79 = vector.broadcast %cst_40 : f32 to vector<4x1x1xf32>
    %80 = arith.addf %78, %79 : vector<4x1x1xf32>
    %81 = math.rsqrt %80 : vector<4x1x1xf32>
    %82 = vector.broadcast %81 : vector<4x1x1xf32> to vector<4x8x16xf32>
    %83 = arith.mulf %71, %82 : vector<4x8x16xf32>
    %84 = vector.broadcast %61 : vector<1x8x16xf32> to vector<4x8x16xf32>
    %85 = arith.mulf %83, %84 : vector<4x8x16xf32>
    %86 = vector.broadcast %63 : vector<1x8x16xf32> to vector<4x8x16xf32>
    %87 = arith.addf %85, %86 : vector<4x8x16xf32>
    %88 = vector.shape_cast %87 : vector<4x8x16xf32> to vector<4x1x128xf32>
    %c0_41 = arith.constant 0 : index
    %c0_42 = arith.constant 0 : index
    %c0_43 = arith.constant 0 : index
    %89 = vector.load %arg12[%c0_41, %c0_42, %c0_43] : memref<4x1x128xf32, #tpu.memory_space<vmem>>, vector<4x1x128xf32>
    tpu.vector_store %arg12[%c0_41, %c0_42, %c0_43], %88 {strides = array<i32>} : memref<4x1x128xf32, #tpu.memory_space<vmem>>, vector<4x1x128xf32>,
    return
  }
  func.func @transform_0(%arg0: i32) -> (i32, i32, i32) {
    %c0_i32 = arith.constant 0 : i32
    %c0_i32_0 = arith.constant 0 : i32
    %c0_i32_1 = arith.constant 0 : i32
    return %arg0, %c0_i32, %c0_i32_0 : i32, i32, i32
  }
  func.func @transform_1(%arg0: i32) -> (i32, i32, i32) {
    %c0_i32 = arith.constant 0 : i32
    %c0_i32_0 = arith.constant 0 : i32
    %c0_i32_1 = arith.constant 0 : i32
    return %arg0, %c0_i32, %c0_i32_0 : i32, i32, i32
  }
  func.func @transform_2(%arg0: i32) -> (i32, i32) {
    %c0_i32 = arith.constant 0 : i32
    %c0_i32_0 = arith.constant 0 : i32
    %c0_i32_1 = arith.constant 0 : i32
    return %c0_i32, %c0_i32_0 : i32, i32
  }
  func.func @transform_3(%arg0: i32) -> (i32, i32) {
    %c0_i32 = arith.constant 0 : i32
    %c0_i32_0 = arith.constant 0 : i32
    %c0_i32_1 = arith.constant 0 : i32
    return %c0_i32, %c0_i32_0 : i32, i32
  }
  func.func @transform_4(%arg0: i32) -> (i32, i32) {
    %c0_i32 = arith.constant 0 : i32
    %c0_i32_0 = arith.constant 0 : i32
    %c0_i32_1 = arith.constant 0 : i32
    return %c0_i32, %c0_i32_0 : i32, i32
  }
  func.func @transform_5(%arg0: i32) -> (i32, i32) {
    %c0_i32 = arith.constant 0 : i32
    %c0_i32_0 = arith.constant 0 : i32
    %c0_i32_1 = arith.constant 0 : i32
    return %c0_i32, %c0_i32_0 : i32, i32
  }
  func.func @transform_6(%arg0: i32) -> (i32, i32) {
    %c0_i32 = arith.constant 0 : i32
    %c0_i32_0 = arith.constant 0 : i32
    %c0_i32_1 = arith.constant 0 : i32
    return %c0_i32, %c0_i32_0 : i32, i32
  }
  func.func @transform_7(%arg0: i32) -> (i32, i32) {
    %c0_i32 = arith.constant 0 : i32
    %c0_i32_0 = arith.constant 0 : i32
    %c0_i32_1 = arith.constant 0 : i32
    return %c0_i32, %c0_i32_0 : i32, i32
  }
  func.func @transform_8(%arg0: i32) -> (i32, i32) {
    %c0_i32 = arith.constant 0 : i32
    %c0_i32_0 = arith.constant 0 : i32
    %c0_i32_1 = arith.constant 0 : i32
    return %c0_i32, %c0_i32_0 : i32, i32
  }
  func.func @transform_9(%arg0: i32) -> (i32, i32) {
    %c0_i32 = arith.constant 0 : i32
    %c0_i32_0 = arith.constant 0 : i32
    %c0_i32_1 = arith.constant 0 : i32
    return %c0_i32, %c0_i32_0 : i32, i32
  }
  func.func @transform_10(%arg0: i32) -> (i32, i32) {
    %c0_i32 = arith.constant 0 : i32
    %c0_i32_0 = arith.constant 0 : i32
    %c0_i32_1 = arith.constant 0 : i32
    return %c0_i32, %c0_i32_0 : i32, i32
  }
  func.func @transform_11(%arg0: i32) -> (i32, i32, i32) {
    %c0_i32 = arith.constant 0 : i32
    %c0_i32_0 = arith.constant 0 : i32
    %c0_i32_1 = arith.constant 0 : i32
    return %arg0, %c0_i32, %c0_i32_0 : i32, i32, i32
  }
}

</mosaic_0001>

<llo_original>
// kernel: conditional_mixer_layer.1
$region0: #{conditional_mixer_layer.1}
  #allocation0 [shape = 'u32[]', space=smem, size = 0x4, offset = 0x4, fixed_abs, tag = 'smem constant byte address 0x4 - core index']
  #allocation1 [shape = 'u32[72,128]{1,0:T(1,128)}', space=vmem, size = 0x9000, scoped, tag = 'internal scratch']
  %s0 = inlined_call_operand.vmem [shape: f32[4,8,4], index: 0, kind: input, shape index: {}]
  %s1 = inlined_call_operand.vmem [shape: f32[4,1,48], index: 1, kind: input, shape index: {}]
  %s2 = inlined_call_operand.vmem [shape: f32[32,32], index: 2, kind: input, shape index: {}]
  %s3 = inlined_call_operand.vmem [shape: f32[8,1], index: 3, kind: input, shape index: {}]
  %s4 = inlined_call_operand.vmem [shape: f32[8,4], index: 4, kind: input, shape index: {}]
  %s5 = inlined_call_operand.vmem [shape: f32[8,4], index: 5, kind: input, shape index: {}]
  %s6 = inlined_call_operand.vmem [shape: f32[4,48], index: 6, kind: input, shape index: {}]
  %s7 = inlined_call_operand.vmem [shape: f32[32,16], index: 7, kind: input, shape index: {}]
  %s8 = inlined_call_operand.vmem [shape: f32[1,16], index: 8, kind: input, shape index: {}]
  %s9 = inlined_call_operand.vmem [shape: f32[8,16], index: 9, kind: input, shape index: {}]
  %s10 = inlined_call_operand.vmem [shape: f32[8,16], index: 10, kind: input, shape index: {}]
  %s11 = inlined_call_operand.vmem [shape: f32[4,1,128], index: 11, kind: output, shape index: {}]
  %s12 = sld [smem:[#allocation0]]
  $region54: #{conditional_mixer_layer.1} parent=0
    _
  %s14 = ssub.s32 1, %s12
  %s15 = scalar_select 0, %s14, %s12
  // Predicated region
  $region2: #{conditional_mixer_layer.1} parent=0 // pred_check
    _
  $region3: #{conditional_mixer_layer.1} parent=0 // pred_check_branch
    %17 = sbr.rel (0) target = $region5
  $region4: #{conditional_mixer_layer.1} parent=0 // pred_region
    _
  $region5: #{conditional_mixer_layer.1} parent=0 // pred_fallthru
    _
  // Predicated region
  $region6: #{conditional_mixer_layer.1} parent=0 // pred_check
    _
  $region7: #{conditional_mixer_layer.1} parent=0 // pred_check_branch
    %19 = sbr.rel (0) target = $region9
  $region8: #{conditional_mixer_layer.1} parent=0 // pred_region
    _
  $region9: #{conditional_mixer_layer.1} parent=0 // pred_fallthru
    _
  // Predicated region
  $region10: #{conditional_mixer_layer.1} parent=0 // pred_check
    _
  $region11: #{conditional_mixer_layer.1} parent=0 // pred_check_branch
    %21 = sbr.rel (0) target = $region13
  $region12: #{conditional_mixer_layer.1} parent=0 // pred_region
    _
  $region13: #{conditional_mixer_layer.1} parent=0 // pred_fallthru
    _
  // Predicated region
  $region14: #{conditional_mixer_layer.1} parent=0 // pred_check
    _
  $region15: #{conditional_mixer_layer.1} parent=0 // pred_check_branch
    %23 = sbr.rel (0) target = $region17
  $region16: #{conditional_mixer_layer.1} parent=0 // pred_region
    _
  $region17: #{conditional_mixer_layer.1} parent=0 // pred_fallthru
    _
  // Predicated region
  $region18: #{conditional_mixer_layer.1} parent=0 // pred_check
    _
  $region19: #{conditional_mixer_layer.1} parent=0 // pred_check_branch
    %25 = sbr.rel (0) target = $region21
  $region20: #{conditional_mixer_layer.1} parent=0 // pred_region
    _
  $region21: #{conditional_mixer_layer.1} parent=0 // pred_fallthru
    _
  // Predicated region
  $region22: #{conditional_mixer_layer.1} parent=0 // pred_check
    _
  $region23: #{conditional_mixer_layer.1} parent=0 // pred_check_branch
    %27 = sbr.rel (0) target = $region25
  $region24: #{conditional_mixer_layer.1} parent=0 // pred_region
    _
  $region25: #{conditional_mixer_layer.1} parent=0 // pred_fallthru
    _
  // Predicated region
  $region26: #{conditional_mixer_layer.1} parent=0 // pred_check
    _
  $region27: #{conditional_mixer_layer.1} parent=0 // pred_check_branch
    %29 = sbr.rel (0) target = $region29
  $region28: #{conditional_mixer_layer.1} parent=0 // pred_region
    _
  $region29: #{conditional_mixer_layer.1} parent=0 // pred_fallthru
    _
  // Predicated region
  $region30: #{conditional_mixer_layer.1} parent=0 // pred_check
    _
  $region31: #{conditional_mixer_layer.1} parent=0 // pred_check_branch
    %31 = sbr.rel (0) target = $region33
  $region32: #{conditional_mixer_layer.1} parent=0 // pred_region
    _
  $region33: #{conditional_mixer_layer.1} parent=0 // pred_fallthru
    _
  // Predicated region
  $region34: #{conditional_mixer_layer.1} parent=0 // pred_check
    _
  $region35: #{conditional_mixer_layer.1} parent=0 // pred_check_branch
    %33 = sbr.rel (0) target = $region37
  $region36: #{conditional_mixer_layer.1} parent=0 // pred_region
    _
  $region37: #{conditional_mixer_layer.1} parent=0 // pred_fallthru
    _
  // Predicated region
  $region38: #{conditional_mixer_layer.1} parent=0 // pred_check
    _
  $region39: #{conditional_mixer_layer.1} parent=0 // pred_check_branch
    %35 = sbr.rel (0) target = $region41
  $region40: #{conditional_mixer_layer.1} parent=0 // pred_region
    _
  $region41: #{conditional_mixer_layer.1} parent=0 // pred_fallthru
    _
  // Predicated region
  $region42: #{conditional_mixer_layer.1} parent=0 // pred_check
    _
  $region43: #{conditional_mixer_layer.1} parent=0 // pred_check_branch
    %37 = sbr.rel (0) target = $region45
  $region44: #{conditional_mixer_layer.1} parent=0 // pred_region
    _
  $region45: #{conditional_mixer_layer.1} parent=0 // pred_fallthru
    _
  %v38 = vld [vmem:[%s0] sm:$0xff]
  %v39 = vld [vmem:[%s0 + $0x8] sm:$0xff]
  %v40 = vld [vmem:[%s0 + $0x10] sm:$0xff]
  %v41 = vld [vmem:[%s0 + $0x18] sm:$0xff]
  %v42 = vld [vmem:[%s2] sm:$0xff]
  %v43 = vld [vmem:[%s2 + $0x8] sm:$0xff]
  %v44 = vld [vmem:[%s2 + $0x10] sm:$0xff]
  %v45 = vld [vmem:[%s2 + $0x18] sm:$0xff]
  %vm46 = vcmask 261120
  %v48 = vsel %vm46, %v42, 0
  %v51 = vsel %vm46, %v43, 0
  %v54 = vsel %vm46, %v44, 0
  %v57 = vsel %vm46, %v45, 0
  %59 = vmatpush.msra.mxu0 0.0
  %60 = vmatpush.msra.mxu0 0.0
  %61 = vmatpush.msra.mxu0 0.0
  %62 = vmatpush.msra.mxu0 0.0
  %63 = vmatpush.msra.mxu0 0.0
  %64 = vmatpush.msra.mxu0 0.0
  %65 = vmatpush.msra.mxu0 0.0
  %66 = vmatpush.msra.mxu0 0.0
  %67 = vmatpush.msra.mxu0 0.0
  %68 = vmatpush.msra.mxu0 0.0
  %69 = vmatpush.msra.mxu0 0.0
  %70 = vmatpush.msra.mxu0 0.0
  %71 = vmatpush.msra.mxu0 %v41
  %72 = vmatpush.msra.mxu0 %v40
  %73 = vmatpush.msra.mxu0 %v39
  %74 = vmatpush.msra.mxu0 %v38
  %75 = vmatmul.f32.gmra.mxu0 %v48
  %v76 = vpop.f32.mrf.mxu0
  %v77 = vadd.f32 0.0, %v76
  %78 = vmatmul.f32.gmra.mxu0 %v51
  %v79 = vpop.f32.mrf.mxu0
  %v80 = vadd.f32 0.0, %v79
  %81 = vmatmul.f32.gmra.mxu0 %v54
  %v82 = vpop.f32.mrf.mxu0
  %v83 = vadd.f32 0.0, %v82
  %84 = vmatmul.f32.gmra.mxu0 %v57
  %v85 = vpop.f32.mrf.mxu0
  %v86 = vadd.f32 0.0, %v85
  %87 = vdwg.mxu0
  %v88 = vld [vmem:[%s3] sm:$0xff]
  %90 = vset.pattern.permute.xlu0 0
  %91 = vperm.xlu0 %90, %v88
  %v92 = vpop.permute.xlu0 %91
  %v94 = vadd.f32 %v77, %v92
  %v95 = vadd.f32 %v80, %v92
  %v96 = vadd.f32 %v83, %v92
  %v97 = vadd.f32 %v86, %v92
  %v98 = vmax.f32 %v94, 0.0
  %v99 = vmax.f32 %v95, 0.0
  %v100 = vmax.f32 %v96, 0.0
  %v101 = vmax.f32 %v97, 0.0
  %v102 = vadd.f32 %v38, %v98
  %v103 = vadd.f32 %v39, %v99
  %v104 = vadd.f32 %v40, %v100
  %v105 = vadd.f32 %v41, %v101
  %v106 = vld [vmem:[%s4] sm:$0xff]
  %v107 = vld [vmem:[%s5] sm:$0xff]
  %vm108 = vcmask 31744
  %v109 = vsel %vm108, %v102, 0.0
  %110 = vadd.xlane.f32.xlu0 %v109
  %v111 = vpop.xlane.xlu0 %110
  %v112 = vsel %vm108, %v103, 0.0
  %113 = vadd.xlane.f32.xlu0 %v112
  %v114 = vpop.xlane.xlu0 %113
  %v115 = vsel %vm108, %v104, 0.0
  %116 = vadd.xlane.f32.xlu0 %v115
  %v117 = vpop.xlane.xlu0 %116
  %v118 = vsel %vm108, %v105, 0.0
  %119 = vadd.xlane.f32.xlu0 %v118
  %v120 = vpop.xlane.xlu0 %119
  %v121 = vrot.slane %v111, 4
  %v122 = vadd.f32 %v111, %v121
  %v123 = vrot.slane %v122, 2
  %v124 = vadd.f32 %v122, %v123
  %v125 = vrot.slane %v124, 1
  %v126 = vadd.f32 %v124, %v125
  %v127 = vrot.slane %v114, 4
  %v128 = vadd.f32 %v114, %v127
  %v129 = vrot.slane %v128, 2
  %v130 = vadd.f32 %v128, %v129
  %v131 = vrot.slane %v130, 1
  %v132 = vadd.f32 %v130, %v131
  %v133 = vrot.slane %v117, 4
  %v134 = vadd.f32 %v117, %v133
  %v135 = vrot.slane %v134, 2
  %v136 = vadd.f32 %v134, %v135
  %v137 = vrot.slane %v136, 1
  %v138 = vadd.f32 %v136, %v137
  %v139 = vrot.slane %v120, 4
  %v140 = vadd.f32 %v120, %v139
  %v141 = vrot.slane %v140, 2
  %v142 = vadd.f32 %v140, %v141
  %v143 = vrot.slane %v142, 1
  %v144 = vadd.f32 %v142, %v143
  %v145 = vrcp.pop 32.0
  %v146 = vmul.f32 32.0, %v145
  %v147 = vsub.f32 1.0, %v146
  %v148 = vmul.f32 %v145, %v147
  %v149 = vadd.f32 %v145, %v148
  %vm150 = vweird.f32 %v145
  %v151 = vsel %vm150, %v145, %v149
  %v152 = vmul.f32 %v126, %v151
  %v153 = vmul.f32 %v132, %v151
  %v154 = vmul.f32 %v138, %v151
  %v155 = vmul.f32 %v144, %v151
  %v156 = vsub.f32 %v102, %v152
  %v157 = vsub.f32 %v103, %v153
  %v158 = vsub.f32 %v104, %v154
  %v159 = vsub.f32 %v105, %v155
  %v160 = vmul.f32 %v156, %v156
  %v161 = vmul.f32 %v157, %v157
  %v162 = vmul.f32 %v158, %v158
  %v163 = vmul.f32 %v159, %v159
  %v164 = vsel %vm108, %v160, 0.0
  %165 = vadd.xlane.f32.xlu0 %v164
  %v166 = vpop.xlane.xlu0 %165
  %v167 = vsel %vm108, %v161, 0.0
  %168 = vadd.xlane.f32.xlu0 %v167
  %v169 = vpop.xlane.xlu0 %168
  %v170 = vsel %vm108, %v162, 0.0
  %171 = vadd.xlane.f32.xlu0 %v170
  %v172 = vpop.xlane.xlu0 %171
  %v173 = vsel %vm108, %v163, 0.0
  %174 = vadd.xlane.f32.xlu0 %v173
  %v175 = vpop.xlane.xlu0 %174
  %v176 = vrot.slane %v166, 4
  %v177 = vadd.f32 %v166, %v176
  %v178 = vrot.slane %v177, 2
  %v179 = vadd.f32 %v177, %v178
  %v180 = vrot.slane %v179, 1
  %v181 = vadd.f32 %v179, %v180
  %v182 = vrot.slane %v169, 4
  %v183 = vadd.f32 %v169, %v182
  %v184 = vrot.slane %v183, 2
  %v185 = vadd.f32 %v183, %v184
  %v186 = vrot.slane %v185, 1
  %v187 = vadd.f32 %v185, %v186
  %v188 = vrot.slane %v172, 4
  %v189 = vadd.f32 %v172, %v188
  %v190 = vrot.slane %v189, 2
  %v191 = vadd.f32 %v189, %v190
  %v192 = vrot.slane %v191, 1
  %v193 = vadd.f32 %v191, %v192
  %v194 = vrot.slane %v175, 4
  %v195 = vadd.f32 %v175, %v194
  %v196 = vrot.slane %v195, 2
  %v197 = vadd.f32 %v195, %v196
  %v198 = vrot.slane %v197, 1
  %v199 = vadd.f32 %v197, %v198
  %v200 = vmul.f32 %v181, %v151
  %v201 = vmul.f32 %v187, %v151
  %v202 = vmul.f32 %v193, %v151
  %v203 = vmul.f32 %v199, %v151
  %v204 = vadd.f32 %v200, 1e-05
  %v205 = vadd.f32 %v201, 1e-05
  %v206 = vadd.f32 %v202, 1e-05
  %v207 = vadd.f32 %v203, 1e-05
  %v208 = vrsqrt.pop %v204
  %v209 = vmul.f32 %v208, %v204
  %v210 = vmul.f32 %v209, %v208
  %v211 = vmul.f32 0.5, %v210
  %v212 = vsub.f32 1.5, %v211
  %v213 = vmul.f32 %v208, %v212
  %vm214 = vweird.f32 %v204
  %vm215 = vweird.f32 %v208
  %vm216 = vmor %vm214, %vm215
  %v217 = vsel %vm216, %v208, %v213
  %v218 = vrsqrt.pop %v205
  %v219 = vmul.f32 %v218, %v205
  %v220 = vmul.f32 %v219, %v218
  %v221 = vmul.f32 0.5, %v220
  %v222 = vsub.f32 1.5, %v221
  %v223 = vmul.f32 %v218, %v222
  %vm224 = vweird.f32 %v205
  %vm225 = vweird.f32 %v218
  %vm226 = vmor %vm224, %vm225
  %v227 = vsel %vm226, %v218, %v223
  %v228 = vrsqrt.pop %v206
  %v229 = vmul.f32 %v228, %v206
  %v230 = vmul.f32 %v229, %v228
  %v231 = vmul.f32 0.5, %v230
  %v232 = vsub.f32 1.5, %v231
  %v233 = vmul.f32 %v228, %v232
  %vm234 = vweird.f32 %v206
  %vm235 = vweird.f32 %v228
  %vm236 = vmor %vm234, %vm235
  %v237 = vsel %vm236, %v228, %v233
  %v238 = vrsqrt.pop %v207
  %v239 = vmul.f32 %v238, %v207
  %v240 = vmul.f32 %v239, %v238
  %v241 = vmul.f32 0.5, %v240
  %v242 = vsub.f32 1.5, %v241
  %v243 = vmul.f32 %v238, %v242
  %vm244 = vweird.f32 %v207
  %vm245 = vweird.f32 %v238
  %vm246 = vmor %vm244, %vm245
  %v247 = vsel %vm246, %v238, %v243
  %v248 = vmul.f32 %v156, %v217
  %v249 = vmul.f32 %v157, %v227
  %v250 = vmul.f32 %v158, %v237
  %v251 = vmul.f32 %v159, %v247
  %v252 = vmul.f32 %v248, %v106
  %v253 = vmul.f32 %v249, %v106
  %v254 = vmul.f32 %v250, %v106
  %v255 = vmul.f32 %v251, %v106
  %v256 = vadd.f32 %v252, %v107
  %v257 = vadd.f32 %v253, %v107
  %v258 = vadd.f32 %v254, %v107
  %v259 = vadd.f32 %v255, %v107
  %v260 = vld [vmem:[%s6] sm:$0xf]
  %v262 = vsel %vm108, %v256, 0
  %v265 = vsel %vm108, %v257, 0
  %v268 = vsel %vm108, %v258, 0
  %v271 = vsel %vm108, %v259, 0
  %vm273 = vcmask 1043456
  %v275 = vsel %vm273, %v260, 0
  %277 = vmatpush.msra.mxu0 0.0
  %278 = vmatpush.msra.mxu0 0.0
  %279 = vmatpush.msra.mxu0 0.0
  %280 = vmatpush.msra.mxu0 0.0
  %281 = vmatpush.msra.mxu0 0.0
  %282 = vmatpush.msra.mxu0 0.0
  %283 = vmatpush.msra.mxu0 0.0
  %284 = vmatpush.msra.mxu0 0.0
  %285 = vmatpush.msra.mxu0 0.0
  %286 = vmatpush.msra.mxu0 0.0
  %287 = vmatpush.msra.mxu0 0.0
  %288 = vmatpush.msra.mxu0 0.0
  %289 = vmatpush.msra.mxu0 0.0
  %290 = vmatpush.msra.mxu0 0.0
  %291 = vmatpush.msra.mxu0 0.0
  %292 = vmatpush.msra.mxu0 %v275
  %293 = vmatmul.f32.gmra.mxu0 %v262
  %v294 = vpop.f32.mrf.mxu0
  %v295 = vadd.f32 0.0, %v294
  %296 = vmatmul.f32.gmra.mxu0 %v265
  %v297 = vpop.f32.mrf.mxu0
  %v298 = vadd.f32 0.0, %v297
  %299 = vmatmul.f32.gmra.mxu0 %v268
  %v300 = vpop.f32.mrf.mxu0
  %v301 = vadd.f32 0.0, %v300
  %302 = vmatmul.f32.gmra.mxu0 %v271
  %v303 = vpop.f32.mrf.mxu0
  %v304 = vadd.f32 0.0, %v303
  %305 = vdwg.mxu0
  %v306 = vld [vmem:[%s1] sm:$0x1]
  %v307 = vld [vmem:[%s1 + $0x1] sm:$0x1]
  %v308 = vld [vmem:[%s1 + $0x2] sm:$0x1]
  %v309 = vld [vmem:[%s1 + $0x3] sm:$0x1]
  %v314 = vperm.slane %v306, 0
  %v315 = vperm.slane %v307, 0
  %v316 = vperm.slane %v308, 0
  %v317 = vperm.slane %v309, 0
  %v322 = vadd.f32 %v295, %v314
  %v323 = vadd.f32 %v298, %v315
  %v324 = vadd.f32 %v301, %v316
  %v325 = vadd.f32 %v304, %v317
  %v326 = vmax.f32 %v322, 0.0
  %v327 = vmax.f32 %v323, 0.0
  %v328 = vmax.f32 %v324, 0.0
  %v329 = vmax.f32 %v325, 0.0
  %v330 = vld [vmem:[%s7] sm:$0xff]
  %v331 = vld [vmem:[%s7 + $0x8] sm:$0xff]
  %v332 = vld [vmem:[%s7 + $0x10] sm:$0xff]
  %v333 = vld [vmem:[%s7 + $0x18] sm:$0xff]
  %v335 = vsel %vm46, %v326, 0
  %v338 = vsel %vm46, %v327, 0
  %v341 = vsel %vm46, %v328, 0
  %v344 = vsel %vm46, %v329, 0
  %346 = vmatpush.msra.mxu0 0.0
  %347 = vmatpush.msra.mxu0 0.0
  %348 = vmatpush.msra.mxu0 0.0
  %349 = vmatpush.msra.mxu0 0.0
  %350 = vmatpush.msra.mxu0 0.0
  %351 = vmatpush.msra.mxu0 0.0
  %352 = vmatpush.msra.mxu0 0.0
  %353 = vmatpush.msra.mxu0 0.0
  %354 = vmatpush.msra.mxu0 0.0
  %355 = vmatpush.msra.mxu0 0.0
  %356 = vmatpush.msra.mxu0 0.0
  %357 = vmatpush.msra.mxu0 0.0
  %358 = vmatpush.msra.mxu0 %v333
  %359 = vmatpush.msra.mxu0 %v332
  %360 = vmatpush.msra.mxu0 %v331
  %361 = vmatpush.msra.mxu0 %v330
  %362 = vmatmul.f32.gmra.mxu0 %v335
  %v363 = vpop.f32.mrf.mxu0
  %v364 = vadd.f32 0.0, %v363
  %365 = vmatmul.f32.gmra.mxu0 %v338
  %v366 = vpop.f32.mrf.mxu0
  %v367 = vadd.f32 0.0, %v366
  %368 = vmatmul.f32.gmra.mxu0 %v341
  %v369 = vpop.f32.mrf.mxu0
  %v370 = vadd.f32 0.0, %v369
  %371 = vmatmul.f32.gmra.mxu0 %v344
  %v372 = vpop.f32.mrf.mxu0
  %v373 = vadd.f32 0.0, %v372
  %374 = vdwg.mxu0
  %379 = vrot.lane.b32.xlu0 %v364, 32
  %v380 = vpop.permute.xlu0 %379
  %381 = vrot.lane.b32.xlu0 %v367, 32
  %v382 = vpop.permute.xlu0 %381
  %383 = vrot.lane.b32.xlu0 %v370, 32
  %v384 = vpop.permute.xlu0 %383
  %385 = vrot.lane.b32.xlu0 %v373, 32
  %v386 = vpop.permute.xlu0 %385
  %v391 = vadd.f32 %v322, %v380
  %v392 = vadd.f32 %v323, %v382
  %v393 = vadd.f32 %v324, %v384
  %v394 = vadd.f32 %v325, %v386
  %v395 = vld [vmem:[%s8] sm:$0x1]
  %v397 = vperm.slane %v395, 0
  %398 = vrot.lane.b32.xlu0 %v397, 32
  %v399 = vpop.permute.xlu0 %398
  %v401 = vadd.f32 %v391, %v399
  %v402 = vadd.f32 %v392, %v399
  %v403 = vadd.f32 %v393, %v399
  %v404 = vadd.f32 %v394, %v399
  %v405 = vld [vmem:[%s9] sm:$0xff]
  %v406 = vld [vmem:[%s10] sm:$0xff]
  %411 = vrot.lane.b32.xlu0 %v401, 96
  %v412 = vpop.permute.xlu0 %411
  %413 = vrot.lane.b32.xlu0 %v402, 96
  %v414 = vpop.permute.xlu0 %413
  %415 = vrot.lane.b32.xlu0 %v403, 96
  %v416 = vpop.permute.xlu0 %415
  %417 = vrot.lane.b32.xlu0 %v404, 96
  %v418 = vpop.permute.xlu0 %417
  %vm423 = vcmask 130048
  %v424 = vsel %vm423, %v412, 0.0
  %425 = vadd.xlane.f32.xlu0 %v424
  %v426 = vpop.xlane.xlu0 %425
  %v427 = vsel %vm423, %v414, 0.0
  %428 = vadd.xlane.f32.xlu0 %v427
  %v429 = vpop.xlane.xlu0 %428
  %v430 = vsel %vm423, %v416, 0.0
  %431 = vadd.xlane.f32.xlu0 %v430
  %v432 = vpop.xlane.xlu0 %431
  %v433 = vsel %vm423, %v418, 0.0
  %434 = vadd.xlane.f32.xlu0 %v433
  %v435 = vpop.xlane.xlu0 %434
  %v436 = vrot.slane %v426, 4
  %v437 = vadd.f32 %v426, %v436
  %v438 = vrot.slane %v437, 2
  %v439 = vadd.f32 %v437, %v438
  %v440 = vrot.slane %v439, 1
  %v441 = vadd.f32 %v439, %v440
  %v442 = vrot.slane %v429, 4
  %v443 = vadd.f32 %v429, %v442
  %v444 = vrot.slane %v443, 2
  %v445 = vadd.f32 %v443, %v444
  %v446 = vrot.slane %v445, 1
  %v447 = vadd.f32 %v445, %v446
  %v448 = vrot.slane %v432, 4
  %v449 = vadd.f32 %v432, %v448
  %v450 = vrot.slane %v449, 2
  %v451 = vadd.f32 %v449, %v450
  %v452 = vrot.slane %v451, 1
  %v453 = vadd.f32 %v451, %v452
  %v454 = vrot.slane %v435, 4
  %v455 = vadd.f32 %v435, %v454
  %v456 = vrot.slane %v455, 2
  %v457 = vadd.f32 %v455, %v456
  %v458 = vrot.slane %v457, 1
  %v459 = vadd.f32 %v457, %v458
  %v460 = vrcp.pop 128.0
  %v461 = vmul.f32 128.0, %v460
  %v462 = vsub.f32 1.0, %v461
  %v463 = vmul.f32 %v460, %v462
  %v464 = vadd.f32 %v460, %v463
  %vm465 = vweird.f32 %v460
  %v466 = vsel %vm465, %v460, %v464
  %v467 = vmul.f32 %v441, %v466
  %v468 = vmul.f32 %v447, %v466
  %v469 = vmul.f32 %v453, %v466
  %v470 = vmul.f32 %v459, %v466
  %v471 = vsub.f32 %v401, %v467
  %v472 = vsub.f32 %v402, %v468
  %v473 = vsub.f32 %v403, %v469
  %v474 = vsub.f32 %v404, %v470
  %v475 = vmul.f32 %v471, %v471
  %v476 = vmul.f32 %v472, %v472
  %v477 = vmul.f32 %v473, %v473
  %v478 = vmul.f32 %v474, %v474
  %483 = vrot.lane.b32.xlu0 %v475, 96
  %v484 = vpop.permute.xlu0 %483
  %485 = vrot.lane.b32.xlu0 %v476, 96
  %v486 = vpop.permute.xlu0 %485
  %487 = vrot.lane.b32.xlu0 %v477, 96
  %v488 = vpop.permute.xlu0 %487
  %489 = vrot.lane.b32.xlu0 %v478, 96
  %v490 = vpop.permute.xlu0 %489
  %v495 = vsel %vm423, %v484, 0.0
  %496 = vadd.xlane.f32.xlu0 %v495
  %v497 = vpop.xlane.xlu0 %496
  %v498 = vsel %vm423, %v486, 0.0
  %499 = vadd.xlane.f32.xlu0 %v498
  %v500 = vpop.xlane.xlu0 %499
  %v501 = vsel %vm423, %v488, 0.0
  %502 = vadd.xlane.f32.xlu0 %v501
  %v503 = vpop.xlane.xlu0 %502
  %v504 = vsel %vm423, %v490, 0.0
  %505 = vadd.xlane.f32.xlu0 %v504
  %v506 = vpop.xlane.xlu0 %505
  %v507 = vrot.slane %v497, 4
  %v508 = vadd.f32 %v497, %v507
  %v509 = vrot.slane %v508, 2
  %v510 = vadd.f32 %v508, %v509
  %v511 = vrot.slane %v510, 1
  %v512 = vadd.f32 %v510, %v511
  %v513 = vrot.slane %v500, 4
  %v514 = vadd.f32 %v500, %v513
  %v515 = vrot.slane %v514, 2
  %v516 = vadd.f32 %v514, %v515
  %v517 = vrot.slane %v516, 1
  %v518 = vadd.f32 %v516, %v517
  %v519 = vrot.slane %v503, 4
  %v520 = vadd.f32 %v503, %v519
  %v521 = vrot.slane %v520, 2
  %v522 = vadd.f32 %v520, %v521
  %v523 = vrot.slane %v522, 1
  %v524 = vadd.f32 %v522, %v523
  %v525 = vrot.slane %v506, 4
  %v526 = vadd.f32 %v506, %v525
  %v527 = vrot.slane %v526, 2
  %v528 = vadd.f32 %v526, %v527
  %v529 = vrot.slane %v528, 1
  %v530 = vadd.f32 %v528, %v529
  %v531 = vmul.f32 %v512, %v466
  %v532 = vmul.f32 %v518, %v466
  %v533 = vmul.f32 %v524, %v466
  %v534 = vmul.f32 %v530, %v466
  %v535 = vadd.f32 %v531, 1e-05
  %v536 = vadd.f32 %v532, 1e-05
  %v537 = vadd.f32 %v533, 1e-05
  %v538 = vadd.f32 %v534, 1e-05
  %v539 = vrsqrt.pop %v535
  %v540 = vmul.f32 %v539, %v535
  %v541 = vmul.f32 %v540, %v539
  %v542 = vmul.f32 0.5, %v541
  %v543 = vsub.f32 1.5, %v542
  %v544 = vmul.f32 %v539, %v543
  %vm545 = vweird.f32 %v535
  %vm546 = vweird.f32 %v539
  %vm547 = vmor %vm545, %vm546
  %v548 = vsel %vm547, %v539, %v544
  %v549 = vrsqrt.pop %v536
  %v550 = vmul.f32 %v549, %v536
  %v551 = vmul.f32 %v550, %v549
  %v552 = vmul.f32 0.5, %v551
  %v553 = vsub.f32 1.5, %v552
  %v554 = vmul.f32 %v549, %v553
  %vm555 = vweird.f32 %v536
  %vm556 = vweird.f32 %v549
  %vm557 = vmor %vm555, %vm556
  %v558 = vsel %vm557, %v549, %v554
  %v559 = vrsqrt.pop %v537
  %v560 = vmul.f32 %v559, %v537
  %v561 = vmul.f32 %v560, %v559
  %v562 = vmul.f32 0.5, %v561
  %v563 = vsub.f32 1.5, %v562
  %v564 = vmul.f32 %v559, %v563
  %vm565 = vweird.f32 %v537
  %vm566 = vweird.f32 %v559
  %vm567 = vmor %vm565, %vm566
  %v568 = vsel %vm567, %v559, %v564
  %v569 = vrsqrt.pop %v538
  %v570 = vmul.f32 %v569, %v538
  %v571 = vmul.f32 %v570, %v569
  %v572 = vmul.f32 0.5, %v571
  %v573 = vsub.f32 1.5, %v572
  %v574 = vmul.f32 %v569, %v573
  %vm575 = vweird.f32 %v538
  %vm576 = vweird.f32 %v569
  %vm577 = vmor %vm575, %vm576
  %v578 = vsel %vm577, %v569, %v574
  %v579 = vmul.f32 %v471, %v548
  %v580 = vmul.f32 %v472, %v558
  %v581 = vmul.f32 %v473, %v568
  %v582 = vmul.f32 %v474, %v578
  %584 = vrot.lane.b32.xlu0 %v405, 32
  %v585 = vpop.permute.xlu0 %584
  %v587 = vmul.f32 %v579, %v585
  %v588 = vmul.f32 %v580, %v585
  %v589 = vmul.f32 %v581, %v585
  %v590 = vmul.f32 %v582, %v585
  %592 = vrot.lane.b32.xlu0 %v406, 32
  %v593 = vpop.permute.xlu0 %592
  %v595 = vadd.f32 %v587, %v593
  %v596 = vadd.f32 %v588, %v593
  %v597 = vadd.f32 %v589, %v593
  %v598 = vadd.f32 %v590, %v593
  %603 = vrot.lane.b32.xlu0 %v595, 96
  %v604 = vpop.permute.xlu0 %603
  %605 = vrot.lane.b32.xlu0 %v596, 96
  %v606 = vpop.permute.xlu0 %605
  %607 = vrot.lane.b32.xlu0 %v597, 96
  %v608 = vpop.permute.xlu0 %607
  %609 = vrot.lane.b32.xlu0 %v598, 96
  %v610 = vpop.permute.xlu0 %609
  %v615 = vrot.slane %v604, 4
  %vm616 = vcmask 1047556
  %v617 = vsel %vm616, 0.0, %v615
  %v619 = vunpack.c.l.s4 1983009808
  %v620 = vunpack.c.0.s8 %v619
  %v621 = vperm.slane %v604, %v620
  %v623 = vunpack.c.l.s4 1983009808
  %v624 = vunpack.c.0.s8 %v623
  %v625 = vperm.slane %v617, %v624
  %v626 = vrot.slane %v621, 4
  %v627 = vsel %vm616, 0.0, %v626
  %v629 = vunpack.c.l.s4 1934713408
  %v630 = vunpack.c.0.s8 %v629
  %v631 = vperm.slane %v621, %v630
  %v633 = vunpack.c.l.s4 1934713408
  %v634 = vunpack.c.0.s8 %v633
  %v635 = vperm.slane %v627, %v634
  %v636 = vrot.slane %v625, 4
  %v637 = vsel %vm616, 0.0, %v636
  %v639 = vunpack.c.l.s4 1934713408
  %v640 = vunpack.c.0.s8 %v639
  %v641 = vperm.slane %v625, %v640
  %v643 = vunpack.c.l.s4 1934713408
  %v644 = vunpack.c.0.s8 %v643
  %v645 = vperm.slane %v637, %v644
  %v646 = vrot.slane %v631, 4
  %v647 = vsel %vm616, 0.0, %v646
  %v648 = vrot.slane %v635, 4
  %v649 = vsel %vm616, 0.0, %v648
  %v650 = vrot.slane %v641, 4
  %v651 = vsel %vm616, 0.0, %v650
  %v652 = vrot.slane %v645, 4
  %v653 = vsel %vm616, 0.0, %v652
  %v654 = vrot.slane %v606, 4
  %v655 = vsel %vm616, 0.0, %v654
  %v657 = vunpack.c.l.s4 1983009808
  %v658 = vunpack.c.0.s8 %v657
  %v659 = vperm.slane %v606, %v658
  %v661 = vunpack.c.l.s4 1983009808
  %v662 = vunpack.c.0.s8 %v661
  %v663 = vperm.slane %v655, %v662
  %v664 = vrot.slane %v659, 4
  %v665 = vsel %vm616, 0.0, %v664
  %v667 = vunpack.c.l.s4 1934713408
  %v668 = vunpack.c.0.s8 %v667
  %v669 = vperm.slane %v659, %v668
  %v671 = vunpack.c.l.s4 1934713408
  %v672 = vunpack.c.0.s8 %v671
  %v673 = vperm.slane %v665, %v672
  %v674 = vrot.slane %v663, 4
  %v675 = vsel %vm616, 0.0, %v674
  %v677 = vunpack.c.l.s4 1934713408
  %v678 = vunpack.c.0.s8 %v677
  %v679 = vperm.slane %v663, %v678
  %v681 = vunpack.c.l.s4 1934713408
  %v682 = vunpack.c.0.s8 %v681
  %v683 = vperm.slane %v675, %v682
  %v684 = vrot.slane %v669, 4
  %v685 = vsel %vm616, 0.0, %v684
  %v686 = vrot.slane %v673, 4
  %v687 = vsel %vm616, 0.0, %v686
  %v688 = vrot.slane %v679, 4
  %v689 = vsel %vm616, 0.0, %v688
  %v690 = vrot.slane %v683, 4
  %v691 = vsel %vm616, 0.0, %v690
  %v692 = vrot.slane %v608, 4
  %v693 = vsel %vm616, 0.0, %v692
  %v695 = vunpack.c.l.s4 1983009808
  %v696 = vunpack.c.0.s8 %v695
  %v697 = vperm.slane %v608, %v696
  %v699 = vunpack.c.l.s4 1983009808
  %v700 = vunpack.c.0.s8 %v699
  %v701 = vperm.slane %v693, %v700
  %v702 = vrot.slane %v697, 4
  %v703 = vsel %vm616, 0.0, %v702
  %v705 = vunpack.c.l.s4 1934713408
  %v706 = vunpack.c.0.s8 %v705
  %v707 = vperm.slane %v697, %v706
  %v709 = vunpack.c.l.s4 1934713408
  %v710 = vunpack.c.0.s8 %v709
  %v711 = vperm.slane %v703, %v710
  %v712 = vrot.slane %v701, 4
  %v713 = vsel %vm616, 0.0, %v712
  %v715 = vunpack.c.l.s4 1934713408
  %v716 = vunpack.c.0.s8 %v715
  %v717 = vperm.slane %v701, %v716
  %v719 = vunpack.c.l.s4 1934713408
  %v720 = vunpack.c.0.s8 %v719
  %v721 = vperm.slane %v713, %v720
  %v722 = vrot.slane %v707, 4
  %v723 = vsel %vm616, 0.0, %v722
  %v724 = vrot.slane %v711, 4
  %v725 = vsel %vm616, 0.0, %v724
  %v726 = vrot.slane %v717, 4
  %v727 = vsel %vm616, 0.0, %v726
  %v728 = vrot.slane %v721, 4
  %v729 = vsel %vm616, 0.0, %v728
  %v730 = vrot.slane %v610, 4
  %v731 = vsel %vm616, 0.0, %v730
  %v733 = vunpack.c.l.s4 1983009808
  %v734 = vunpack.c.0.s8 %v733
  %v735 = vperm.slane %v610, %v734
  %v737 = vunpack.c.l.s4 1983009808
  %v738 = vunpack.c.0.s8 %v737
  %v739 = vperm.slane %v731, %v738
  %v740 = vrot.slane %v735, 4
  %v741 = vsel %vm616, 0.0, %v740
  %v743 = vunpack.c.l.s4 1934713408
  %v744 = vunpack.c.0.s8 %v743
  %v745 = vperm.slane %v735, %v744
  %v747 = vunpack.c.l.s4 1934713408
  %v748 = vunpack.c.0.s8 %v747
  %v749 = vperm.slane %v741, %v748
  %v750 = vrot.slane %v739, 4
  %v751 = vsel %vm616, 0.0, %v750
  %v753 = vunpack.c.l.s4 1934713408
  %v754 = vunpack.c.0.s8 %v753
  %v755 = vperm.slane %v739, %v754
  %v757 = vunpack.c.l.s4 1934713408
  %v758 = vunpack.c.0.s8 %v757
  %v759 = vperm.slane %v751, %v758
  %v760 = vrot.slane %v745, 4
  %v761 = vsel %vm616, 0.0, %v760
  %v762 = vrot.slane %v749, 4
  %v763 = vsel %vm616, 0.0, %v762
  %v764 = vrot.slane %v755, 4
  %v765 = vsel %vm616, 0.0, %v764
  %v766 = vrot.slane %v759, 4
  %v767 = vsel %vm616, 0.0, %v766
  %772 = vrot.lane.b32.xlu0 %v647, 16
  %v773 = vpop.permute.xlu0 %772
  %774 = vrot.lane.b32.xlu0 %v685, 16
  %v775 = vpop.permute.xlu0 %774
  %776 = vrot.lane.b32.xlu0 %v723, 16
  %v777 = vpop.permute.xlu0 %776
  %778 = vrot.lane.b32.xlu0 %v761, 16
  %v779 = vpop.permute.xlu0 %778
  %788 = vrot.lane.b32.xlu0 %v635, 32
  %v789 = vpop.permute.xlu0 %788
  %790 = vrot.lane.b32.xlu0 %v673, 32
  %v791 = vpop.permute.xlu0 %790
  %792 = vrot.lane.b32.xlu0 %v711, 32
  %v793 = vpop.permute.xlu0 %792
  %794 = vrot.lane.b32.xlu0 %v749, 32
  %v795 = vpop.permute.xlu0 %794
  %804 = vrot.lane.b32.xlu0 %v649, 48
  %v805 = vpop.permute.xlu0 %804
  %806 = vrot.lane.b32.xlu0 %v687, 48
  %v807 = vpop.permute.xlu0 %806
  %808 = vrot.lane.b32.xlu0 %v725, 48
  %v809 = vpop.permute.xlu0 %808
  %810 = vrot.lane.b32.xlu0 %v763, 48
  %v811 = vpop.permute.xlu0 %810
  %820 = vrot.lane.b32.xlu0 %v641, 64
  %v821 = vpop.permute.xlu0 %820
  %822 = vrot.lane.b32.xlu0 %v679, 64
  %v823 = vpop.permute.xlu0 %822
  %824 = vrot.lane.b32.xlu0 %v717, 64
  %v825 = vpop.permute.xlu0 %824
  %826 = vrot.lane.b32.xlu0 %v755, 64
  %v827 = vpop.permute.xlu0 %826
  %836 = vrot.lane.b32.xlu0 %v651, 80
  %v837 = vpop.permute.xlu0 %836
  %838 = vrot.lane.b32.xlu0 %v689, 80
  %v839 = vpop.permute.xlu0 %838
  %840 = vrot.lane.b32.xlu0 %v727, 80
  %v841 = vpop.permute.xlu0 %840
  %842 = vrot.lane.b32.xlu0 %v765, 80
  %v843 = vpop.permute.xlu0 %842
  %852 = vrot.lane.b32.xlu0 %v645, 96
  %v853 = vpop.permute.xlu0 %852
  %854 = vrot.lane.b32.xlu0 %v683, 96
  %v855 = vpop.permute.xlu0 %854
  %856 = vrot.lane.b32.xlu0 %v721, 96
  %v857 = vpop.permute.xlu0 %856
  %858 = vrot.lane.b32.xlu0 %v759, 96
  %v859 = vpop.permute.xlu0 %858
  %868 = vrot.lane.b32.xlu0 %v653, 112
  %v869 = vpop.permute.xlu0 %868
  %870 = vrot.lane.b32.xlu0 %v691, 112
  %v871 = vpop.permute.xlu0 %870
  %872 = vrot.lane.b32.xlu0 %v729, 112
  %v873 = vpop.permute.xlu0 %872
  %874 = vrot.lane.b32.xlu0 %v767, 112
  %v875 = vpop.permute.xlu0 %874
  %v880 = vsel %vm423, %v631, %v773
  %v881 = vsel %vm423, %v669, %v775
  %v882 = vsel %vm423, %v707, %v777
  %v883 = vsel %vm423, %v745, %v779
  %v884 = vsel %vm46, %v880, %v789
  %v885 = vsel %vm46, %v881, %v791
  %v886 = vsel %vm46, %v882, %v793
  %v887 = vsel %vm46, %v883, %v795
  %vm888 = vcmask 392192
  %v889 = vsel %vm888, %v884, %v805
  %v890 = vsel %vm888, %v885, %v807
  %v891 = vsel %vm888, %v886, %v809
  %v892 = vsel %vm888, %v887, %v811
  %vm893 = vcmask 523264
  %v894 = vsel %vm893, %v889, %v821
  %v895 = vsel %vm893, %v890, %v823
  %v896 = vsel %vm893, %v891, %v825
  %v897 = vsel %vm893, %v892, %v827
  %vm898 = vcmask 654336
  %v899 = vsel %vm898, %v894, %v837
  %v900 = vsel %vm898, %v895, %v839
  %v901 = vsel %vm898, %v896, %v841
  %v902 = vsel %vm898, %v897, %v843
  %vm903 = vcmask 785408
  %v904 = vsel %vm903, %v899, %v853
  %v905 = vsel %vm903, %v900, %v855
  %v906 = vsel %vm903, %v901, %v857
  %v907 = vsel %vm903, %v902, %v859
  %vm908 = vcmask 916480
  %v909 = vsel %vm908, %v904, %v869
  %v910 = vsel %vm908, %v905, %v871
  %v911 = vsel %vm908, %v906, %v873
  %v912 = vsel %vm908, %v907, %v875
  %913 = vst [vmem:[%s11] sm:$0x1] %v909
  %914 = vst [vmem:[%s11 + $0x1] sm:$0x1] %v910
  %915 = vst [vmem:[%s11 + $0x2] sm:$0x1] %v911
  %916 = vst [vmem:[%s11 + $0x3] sm:$0x1] %v912
  // Predicated region
  $region46: #{conditional_mixer_layer.1} parent=0 // pred_check
    _
  $region47: #{conditional_mixer_layer.1} parent=0 // pred_check_branch
    %918 = sbr.rel (0) target = $region49
  $region48: #{conditional_mixer_layer.1} parent=0 // pred_region
    _
  $region49: #{conditional_mixer_layer.1} parent=0 // pred_fallthru
    _
  // Predicated region
  $region50: #{conditional_mixer_layer.1} parent=0 // pred_check
    _
  $region51: #{conditional_mixer_layer.1} parent=0 // pred_check_branch
    %920 = sbr.rel (0) target = $region53
  $region52: #{conditional_mixer_layer.1} parent=0 // pred_region
    _
  $region53: #{conditional_mixer_layer.1} parent=0 // pred_fallthru
    _

</llo_original>
